<compile_context>
chip_gen: v5e
topology: v5e:2x2
jax: 0.10.0
libtpu: 0.0.40
codegen_flags: <defaults>
</compile_context>

<pallas_src>
import jax
import jax.numpy as jnp
import numpy as np
from jax.experimental import pallas as pl
from jax.experimental.pallas import tpu as pltpu


def _round_up(n, m):
    return ((n + m - 1) // m) * m


def _largest_divisor_leq(n, cap):
    for d in range(min(n, cap), 0, -1):
        if n % d == 0:
            return d
    return 1


# ---------------------------------------------------------------------------
# Kernel 1: forward full 2D DFT of the real input, TB batch elements per step
# ---------------------------------------------------------------------------
def _fft2_kernel(x_ref, dtr_ref, dti_ref, dfr_ref, dfi_ref, dfs_ref,
                 zr_ref, zi_ref, wr_s, wi_s):
    TB, F, T = x_ref.shape

    # time DFT: x real -> 2 matmuls, batch folded into M (M = TB*F)
    x = x_ref[...].reshape(TB * F, T)
    wr = jnp.dot(x, dtr_ref[...], preferred_element_type=jnp.float32)   # (TB*F, T)
    wi = jnp.dot(x, dti_ref[...], preferred_element_type=jnp.float32)

    # regroup (TB, F, T) -> (F, TB*T) through VMEM scratch so the freq DFT is
    # one fat matmul per Gauss term (N = TB*T)
    for b in range(TB):
        wr_s[:, b * T:(b + 1) * T] = wr[b * F:(b + 1) * F, :]
        wi_s[:, b * T:(b + 1) * T] = wi[b * F:(b + 1) * F, :]
    wrg = wr_s[...]                                                      # (F, TB*T)
    wig = wi_s[...]

    # freq DFT: complex x complex, Gauss 3-matmul identity
    m1 = jnp.dot(dfr_ref[...], wrg, preferred_element_type=jnp.float32)
    m2 = jnp.dot(dfi_ref[...], wig, preferred_element_type=jnp.float32)
    m3 = jnp.dot(dfs_ref[...], wrg + wig, preferred_element_type=jnp.float32)
    zrf = m1 - m2                                                        # (F, TB*T)
    zif = m3 - m1 - m2

    for b in range(TB):
        zr_ref[b] = zrf[:, b * T:(b + 1) * T]
        zi_ref[b] = zif[:, b * T:(b + 1) * T]


# ---------------------------------------------------------------------------
# Kernel 2: complex filter multiply + inverse 2D DFT; one batch element and a
# TF-filter tile per step (grid: filters outer, batch inner)
# ---------------------------------------------------------------------------
def _filt_kernel(zr_ref, zi_ref, hr_ref, hi_ref,
                 efr_ref, efi_ref, efs_ref,
                 etr_ref, eti_ref, ets_ref,
                 or_ref, oi_ref, sr_s, si_s):
    _, TF, F, T = hr_ref.shape
    N_Tp = etr_ref.shape[1]

    zr = zr_ref[0]                                                       # (F, T)
    zi = zi_ref[0]
    hr = hr_ref[0]                                                       # (TF, F, T)
    hi = hi_ref[0]

    # complex filter multiply, broadcast over the filter tile (leading dim),
    # then filters folded into the M dim of the stage-A matmuls
    pr = (zr[None] * hr - zi[None] * hi).reshape(TF * F, T)
    pi = (zr[None] * hi + zi[None] * hr).reshape(TF * F, T)

    # stage A: inverse DFT along time (cols pre-sliced/zeroed past N_T),
    # complex x complex via Gauss 3 matmuls; M = TF*F (fat), K = T, N = N_Tp
    etr = etr_ref[...]
    eti = eti_ref[...]
    ets = ets_ref[...]
    m1 = jnp.dot(pr, etr, preferred_element_type=jnp.float32)
    m2 = jnp.dot(pi, eti, preferred_element_type=jnp.float32)
    m3 = jnp.dot(pr + pi, ets, preferred_element_type=jnp.float32)
    rr = m1 - m2                                                         # (TF*F, N_Tp)
    ri = m3 - m1 - m2

    # regroup (TF, F, N_Tp) -> (F, TF*N_Tp) through VMEM scratch so stage B is
    # one fat matmul per Gauss term with the filter tile folded into N
    for f in range(TF):
        sr_s[:, f * N_Tp:(f + 1) * N_Tp] = rr[f * F:(f + 1) * F, :]
        si_s[:, f * N_Tp:(f + 1) * N_Tp] = ri[f * F:(f + 1) * F, :]
    sr = sr_s[...]                                                       # (F, TF*N_Tp)
    si = si_s[...]

    # stage B: inverse DFT along freq, rows pre-sliced to the kept N_F window;
    # M = N_Fp, K = F, N = TF*N_Tp (lane-dense output block)
    n1 = jnp.dot(efr_ref[...], sr, preferred_element_type=jnp.float32)
    n2 = jnp.dot(efi_ref[...], si, preferred_element_type=jnp.float32)
    n3 = jnp.dot(efs_ref[...], sr + si, preferred_element_type=jnp.float32)
    or_ref[0, 0] = n1 - n2
    oi_ref[0, 0] = n3 - n1 - n2


# ---------------------------------------------------------------------------
# Wrapper
# ---------------------------------------------------------------------------
def apply_filt_in_fourier_2d(x, all_Hts, N_F, N_T, *, max_tb=8, max_tf=16):
    """x: (B, 1, F, T) float32.  all_Hts: (NFILT, F, T, 2) float32.
    Returns (B, NFILT, N_F, N_T, 2) float32 (real/imag stacked, like torch)."""
    B, C, F, T = x.shape
    assert C == 1, "module squeezes channel dim; C must be 1"
    NFILT = all_Hts.shape[0]

    # padded output window (sublane / lane friendly); padded rows/cols are zero
    N_Fp = _round_up(N_F, 8)
    N_Tp = _round_up(N_T, 128) if N_T > 64 else _round_up(N_T, 8)

    # --- per-generation VMEM budget ---
    try:
        phys_vmem = int(pltpu.get_tpu_info().vmem_capacity_bytes)
    except Exception:
        phys_vmem = 64 * 2**20          # conservative fallback (v7x-sized)

    def _k1_bytes(tb):
        blocks = 2 * (3 * tb * F * T + 2 * T * T + 3 * F * F)
        scratch = 2 * F * tb * T
        live = 7 * tb * F * T
        return 4 * (blocks + scratch + live)

    def _k2_bytes(tf):
        blocks = 2 * (2 * F * T + 2 * tf * F * T + 3 * N_Fp * F
                      + 3 * T * N_Tp + 2 * N_Fp * tf * N_Tp)
        scratch = 2 * F * tf * N_Tp
        live = 4 * tf * F * T + 6 * tf * F * N_Tp + 6 * N_Fp * tf * N_Tp
        return 4 * (blocks + scratch + live)

    budget = phys_vmem // 2
    TB = _largest_divisor_leq(B, max_tb)
    while TB > 1 and _k1_bytes(TB) > budget:
        TB = _largest_divisor_leq(B, TB - 1)
    TF = _largest_divisor_leq(NFILT, max_tf)
    while TF > 1 and _k2_bytes(TF) > budget:
        TF = _largest_divisor_leq(NFILT, TF - 1)
    G = NFILT // TF

    vmem_limit = int(min(phys_vmem * 3 // 4,
                         max(16 * 2**20, 2 * max(_k1_bytes(TB), _k2_bytes(TF)))))

    x2 = x[:, 0, :, :].astype(jnp.float32)                               # (B, F, T)
    hr = all_Hts[..., 0].astype(jnp.float32).reshape(G, TF, F, T)
    hi = all_Hts[..., 1].astype(jnp.float32).reshape(G, TF, F, T)

    # --- forward DFT matrices (host precompute) ---
    kf = np.arange(F)
    kt = np.arange(T)
    ang_f = -2.0 * np.pi * np.outer(kf, kf) / F
    ang_t = -2.0 * np.pi * np.outer(kt, kt) / T
    dfr = np.cos(ang_f)
    dfi = np.sin(ang_f)
    dfs = dfr + dfi                                                      # Gauss helper
    dtr = np.cos(ang_t)
    dti = np.sin(ang_t)

    # --- inverse DFT matrices, pre-sliced to the kept rows/cols and padded ---
    nf = np.arange(N_Fp)[:, None]
    gf = np.arange(F)[None, :]
    ang_ef = 2.0 * np.pi * nf * gf / F
    efr = np.cos(ang_ef) / F
    efi = np.sin(ang_ef) / F
    efr[N_F:, :] = 0.0
    efi[N_F:, :] = 0.0
    ut = np.arange(T)[:, None]
    mt = np.arange(N_Tp)[None, :]
    ang_et = 2.0 * np.pi * ut * mt / T
    etr = np.cos(ang_et) / T
    eti = np.sin(ang_et) / T
    etr[:, N_T:] = 0.0
    eti[:, N_T:] = 0.0
    efs = efr + efi                                                      # Gauss helpers,
    ets = etr + eti                                                      # built AFTER zeroing

    as_f32 = lambda a: jnp.asarray(a, dtype=jnp.float32)
    dfr, dfi, dfs, dtr, dti = map(as_f32, (dfr, dfi, dfs, dtr, dti))
    efr, efi, efs, etr, eti, ets = map(as_f32, (efr, efi, efs, etr, eti, ets))

    # --- kernel 1: forward 2D DFT, TB batch elements per step ---
    zr, zi = pl.pallas_call(
        _fft2_kernel,
        out_shape=(jax.ShapeDtypeStruct((B, F, T), jnp.float32),
                   jax.ShapeDtypeStruct((B, F, T), jnp.float32)),
        grid_spec=pltpu.PrefetchScalarGridSpec(
            num_scalar_prefetch=0,
            grid=(B // TB,),
            in_specs=[
                pl.BlockSpec((TB, F, T), lambda b: (b, 0, 0)),   # x
                pl.BlockSpec((T, T), lambda b: (0, 0)),          # dtr
                pl.BlockSpec((T, T), lambda b: (0, 0)),          # dti
                pl.BlockSpec((F, F), lambda b: (0, 0)),          # dfr
                pl.BlockSpec((F, F), lambda b: (0, 0)),          # dfi
                pl.BlockSpec((F, F), lambda b: (0, 0)),          # dfs
            ],
            out_specs=[
                pl.BlockSpec((TB, F, T), lambda b: (b, 0, 0)),
                pl.BlockSpec((TB, F, T), lambda b: (b, 0, 0)),
            ],
            scratch_shapes=[pltpu.VMEM((F, TB * T), jnp.float32),
                            pltpu.VMEM((F, TB * T), jnp.float32)],
        ),
        compiler_params=pltpu.CompilerParams(
            dimension_semantics=("parallel",),
            vmem_limit_bytes=vmem_limit),
    )(x2, dtr, dti, dfr, dfi, dfs)

    # --- kernel 2: filter + inverse DFT; filters outer, batch inner ---
    out_r, out_i = pl.pallas_call(
        _filt_kernel,
        out_shape=(jax.ShapeDtypeStruct((B, G, N_Fp, TF * N_Tp), jnp.float32),
                   jax.ShapeDtypeStruct((B, G, N_Fp, TF * N_Tp), jnp.float32)),
        grid_spec=pltpu.PrefetchScalarGridSpec(
            num_scalar_prefetch=0,
            grid=(G, B),                                 # filter tiles outer, batch fast
            in_specs=[
                pl.BlockSpec((1, F, T), lambda g, b: (b, 0, 0)),          # zr
                pl.BlockSpec((1, F, T), lambda g, b: (b, 0, 0)),          # zi
                pl.BlockSpec((1, TF, F, T), lambda g, b: (g, 0, 0, 0)),   # hr
                pl.BlockSpec((1, TF, F, T), lambda g, b: (g, 0, 0, 0)),   # hi
                pl.BlockSpec((N_Fp, F), lambda g, b: (0, 0)),             # efr
                pl.BlockSpec((N_Fp, F), lambda g, b: (0, 0)),             # efi
                pl.BlockSpec((N_Fp, F), lambda g, b: (0, 0)),             # efs
                pl.BlockSpec((T, N_Tp), lambda g, b: (0, 0)),             # etr
                pl.BlockSpec((T, N_Tp), lambda g, b: (0, 0)),             # eti
                pl.BlockSpec((T, N_Tp), lambda g, b: (0, 0)),             # ets
            ],
            out_specs=[
                pl.BlockSpec((1, 1, N_Fp, TF * N_Tp), lambda g, b: (b, g, 0, 0)),
                pl.BlockSpec((1, 1, N_Fp, TF * N_Tp), lambda g, b: (b, g, 0, 0)),
            ],
            scratch_shapes=[pltpu.VMEM((F, TF * N_Tp), jnp.float32),
                            pltpu.VMEM((F, TF * N_Tp), jnp.float32)],
        ),
        compiler_params=pltpu.CompilerParams(
            dimension_semantics=("parallel", "parallel"),
            vmem_limit_bytes=vmem_limit),
    )(zr, zi, hr, hi, efr, efi, efs, etr, eti, ets)

    # un-group filters, slice the small padded window, then stack real/imag
    def _finish(o):
        o = o.reshape(B, G, N_Fp, TF, N_Tp)
        o = jnp.transpose(o, (0, 1, 3, 2, 4)).reshape(B, NFILT, N_Fp, N_Tp)
        return o[:, :, :N_F, :N_T]

    return jnp.stack([_finish(out_r), _finish(out_i)], axis=-1)          # (B, NFILT, N_F, N_T, 2)


def _reference(x, all_Hts, N_F, N_T):
    """Pure-JAX reference mirroring the PyTorch forward."""
    x2 = x[:, 0, :, :]
    x_fft = jnp.fft.fft2(x2)                                   # rfft onesided=False == full fft2
    H = all_Hts[..., 0] + 1j * all_Hts[..., 1]                 # (NFILT, F, T)
    filt = x_fft[:, None, :, :] * H[None, :, :, :]             # (B, NFILT, F, T)
    y = jnp.fft.ifft2(filt)
    out = jnp.stack([y.real, y.imag], axis=-1)
    return out[:, :, :N_F, :N_T, :].astype(jnp.float32)


if __name__ == "__main__":
    B, F, T = 2, 16, 16
    NFILT = 4
    N_F, N_T = 12, 10

    key = jax.random.PRNGKey(0)
    kx, kh = jax.random.split(key)
    x = jax.random.normal(kx, (B, 1, F, T), dtype=jnp.float32)            # NCHW input
    all_Hts = jax.random.normal(kh, (NFILT, F, T, 2), dtype=jnp.float32)  # complex filterbank

    out = apply_filt_in_fourier_2d(x, all_Hts, N_F, N_T)
    out = jax.block_until_ready(out)

    ref = _reference(x, all_Hts, N_F, N_T)
    assert out.shape == (B, NFILT, N_F, N_T, 2), out.shape
    np.testing.assert_allclose(np.asarray(out), np.asarray(ref), rtol=1e-3, atol=1e-3)

    print("KERNEL_OK")
</pallas_src>

<mosaic_0001>
module attributes {stable_mosaic.version = 11 : i64} {
  func.func @_fft2_kernel(%arg0: i32, %arg1: memref<2x16x16xf32, #tpu.memory_space<vmem>>, %arg2: memref<16x16xf32, #tpu.memory_space<vmem>>, %arg3: memref<16x16xf32, #tpu.memory_space<vmem>>, %arg4: memref<16x16xf32, #tpu.memory_space<vmem>>, %arg5: memref<16x16xf32, #tpu.memory_space<vmem>>, %arg6: memref<16x16xf32, #tpu.memory_space<vmem>>, %arg7: memref<2x16x16xf32, #tpu.memory_space<vmem>>, %arg8: memref<2x16x16xf32, #tpu.memory_space<vmem>>, %arg9: memref<16x32xf32, #tpu.memory_space<vmem>>, %arg10: memref<16x32xf32, #tpu.memory_space<vmem>>) attributes {dimension_semantics = [#tpu.dimension_semantics<parallel>], iteration_bounds = array<i64: 1>, scalar_prefetch = 0 : i64, scratch_operands = 2 : i64, tpu.core_type = #tpu.core_type<tc>, window_params = [{transform_indices = @transform_0, window_bounds = array<i64: 2, 16, 16>}, {pipeline_mode = #tpu.pipeline_mode<synchronous>, transform_indices = @transform_1, window_bounds = array<i64: 16, 16>}, {pipeline_mode = #tpu.pipeline_mode<synchronous>, transform_indices = @transform_2, window_bounds = array<i64: 16, 16>}, {pipeline_mode = #tpu.pipeline_mode<synchronous>, transform_indices = @transform_3, window_bounds = array<i64: 16, 16>}, {pipeline_mode = #tpu.pipeline_mode<synchronous>, transform_indices = @transform_4, window_bounds = array<i64: 16, 16>}, {pipeline_mode = #tpu.pipeline_mode<synchronous>, transform_indices = @transform_5, window_bounds = array<i64: 16, 16>}, {transform_indices = @transform_6, window_bounds = array<i64: 2, 16, 16>}, {transform_indices = @transform_7, window_bounds = array<i64: 2, 16, 16>}]} {
    %c0 = arith.constant 0 : index
    %c0_0 = arith.constant 0 : index
    %c0_1 = arith.constant 0 : index
    %0 = vector.load %arg1[%c0, %c0_0, %c0_1] : memref<2x16x16xf32, #tpu.memory_space<vmem>>, vector<2x16x16xf32>
    %1 = vector.shape_cast %0 : vector<2x16x16xf32> to vector<32x16xf32>
    %c0_2 = arith.constant 0 : index
    %c0_3 = arith.constant 0 : index
    %2 = vector.load %arg2[%c0_2, %c0_3] : memref<16x16xf32, #tpu.memory_space<vmem>>, vector<16x16xf32>
    %cst = arith.constant dense<0.000000e+00> : vector<32x16xf32>
    %3 = tpu.matmul %1, %2, %cst {dimension_numbers = #tpu.dot_dimension_numbers<[1], [0], [0], [1], [0, 0, 1, 1], [], []>} : vector<32x16xf32>, vector<16x16xf32>, vector<32x16xf32> -> vector<32x16xf32>
    %c0_4 = arith.constant 0 : index
    %c0_5 = arith.constant 0 : index
    %4 = vector.load %arg3[%c0_4, %c0_5] : memref<16x16xf32, #tpu.memory_space<vmem>>, vector<16x16xf32>
    %cst_6 = arith.constant dense<0.000000e+00> : vector<32x16xf32>
    %5 = tpu.matmul %1, %4, %cst_6 {dimension_numbers = #tpu.dot_dimension_numbers<[1], [0], [0], [1], [0, 0, 1, 1], [], []>} : vector<32x16xf32>, vector<16x16xf32>, vector<32x16xf32> -> vector<32x16xf32>
    %6 = vector.extract_strided_slice %3 {offsets = [0, 0], sizes = [16, 16], strides = [1, 1]} : vector<32x16xf32> to vector<16x16xf32>
    %c0_7 = arith.constant 0 : index
    %c0_8 = arith.constant 0 : index
    %7 = vector.load %arg9[%c0_7, %c0_8] : memref<16x32xf32, #tpu.memory_space<vmem>>, vector<16x16xf32>
    tpu.vector_store %arg9[%c0_7, %c0_8], %6 {strides = array<i32>} : memref<16x32xf32, #tpu.memory_space<vmem>>, vector<16x16xf32>,
    %8 = vector.extract_strided_slice %5 {offsets = [0, 0], sizes = [16, 16], strides = [1, 1]} : vector<32x16xf32> to vector<16x16xf32>
    %c0_9 = arith.constant 0 : index
    %c0_10 = arith.constant 0 : index
    %9 = vector.load %arg10[%c0_9, %c0_10] : memref<16x32xf32, #tpu.memory_space<vmem>>, vector<16x16xf32>
    tpu.vector_store %arg10[%c0_9, %c0_10], %8 {strides = array<i32>} : memref<16x32xf32, #tpu.memory_space<vmem>>, vector<16x16xf32>,
    %10 = vector.extract_strided_slice %3 {offsets = [16, 0], sizes = [16, 16], strides = [1, 1]} : vector<32x16xf32> to vector<16x16xf32>
    %c0_11 = arith.constant 0 : index
    %c16 = arith.constant 16 : index
    %11 = vector.load %arg9[%c0_11, %c16] : memref<16x32xf32, #tpu.memory_space<vmem>>, vector<16x16xf32>
    tpu.vector_store %arg9[%c0_11, %c16], %10 {strides = array<i32>} : memref<16x32xf32, #tpu.memory_space<vmem>>, vector<16x16xf32>,
    %12 = vector.extract_strided_slice %5 {offsets = [16, 0], sizes = [16, 16], strides = [1, 1]} : vector<32x16xf32> to vector<16x16xf32>
    %c0_12 = arith.constant 0 : index
    %c16_13 = arith.constant 16 : index
    %13 = vector.load %arg10[%c0_12, %c16_13] : memref<16x32xf32, #tpu.memory_space<vmem>>, vector<16x16xf32>
    tpu.vector_store %arg10[%c0_12, %c16_13], %12 {strides = array<i32>} : memref<16x32xf32, #tpu.memory_space<vmem>>, vector<16x16xf32>,
    %c0_14 = arith.constant 0 : index
    %c0_15 = arith.constant 0 : index
    %14 = vector.load %arg9[%c0_14, %c0_15] : memref<16x32xf32, #tpu.memory_space<vmem>>, vector<16x32xf32>
    %c0_16 = arith.constant 0 : index
    %c0_17 = arith.constant 0 : index
    %15 = vector.load %arg10[%c0_16, %c0_17] : memref<16x32xf32, #tpu.memory_space<vmem>>, vector<16x32xf32>
    %c0_18 = arith.constant 0 : index
    %c0_19 = arith.constant 0 : index
    %16 = vector.load %arg4[%c0_18, %c0_19] : memref<16x16xf32, #tpu.memory_space<vmem>>, vector<16x16xf32>
    %cst_20 = arith.constant dense<0.000000e+00> : vector<16x32xf32>
    %17 = tpu.matmul %16, %14, %cst_20 {dimension_numbers = #tpu.dot_dimension_numbers<[1], [0], [0], [1], [0, 0, 1, 1], [], []>} : vector<16x16xf32>, vector<16x32xf32>, vector<16x32xf32> -> vector<16x32xf32>
    %c0_21 = arith.constant 0 : index
    %c0_22 = arith.constant 0 : index
    %18 = vector.load %arg5[%c0_21, %c0_22] : memref<16x16xf32, #tpu.memory_space<vmem>>, vector<16x16xf32>
    %cst_23 = arith.constant dense<0.000000e+00> : vector<16x32xf32>
    %19 = tpu.matmul %18, %15, %cst_23 {dimension_numbers = #tpu.dot_dimension_numbers<[1], [0], [0], [1], [0, 0, 1, 1], [], []>} : vector<16x16xf32>, vector<16x32xf32>, vector<16x32xf32> -> vector<16x32xf32>
    %c0_24 = arith.constant 0 : index
    %c0_25 = arith.constant 0 : index
    %20 = vector.load %arg6[%c0_24, %c0_25] : memref<16x16xf32, #tpu.memory_space<vmem>>, vector<16x16xf32>
    %21 = arith.addf %14, %15 : vector<16x32xf32>
    %cst_26 = arith.constant dense<0.000000e+00> : vector<16x32xf32>
    %22 = tpu.matmul %20, %21, %cst_26 {dimension_numbers = #tpu.dot_dimension_numbers<[1], [0], [0], [1], [0, 0, 1, 1], [], []>} : vector<16x16xf32>, vector<16x32xf32>, vector<16x32xf32> -> vector<16x32xf32>
    %23 = arith.subf %17, %19 : vector<16x32xf32>
    %24 = arith.subf %22, %17 : vector<16x32xf32>
    %25 = arith.subf %24, %19 : vector<16x32xf32>
    %26 = vector.extract_strided_slice %23 {offsets = [0, 0], sizes = [16, 16], strides = [1, 1]} : vector<16x32xf32> to vector<16x16xf32>
    %c0_27 = arith.constant 0 : index
    %c0_28 = arith.constant 0 : index
    %c0_29 = arith.constant 0 : index
    %27 = vector.load %arg7[%c0_27, %c0_28, %c0_29] : memref<2x16x16xf32, #tpu.memory_space<vmem>>, vector<1x16x16xf32>
    %28 = vector.shape_cast %27 : vector<1x16x16xf32> to vector<16x16xf32>
    %29 = vector.shape_cast %26 : vector<16x16xf32> to vector<1x16x16xf32>
    tpu.vector_store %arg7[%c0_27, %c0_28, %c0_29], %29 {strides = array<i32>} : memref<2x16x16xf32, #tpu.memory_space<vmem>>, vector<1x16x16xf32>,
    %30 = vector.extract_strided_slice %25 {offsets = [0, 0], sizes = [16, 16], strides = [1, 1]} : vector<16x32xf32> to vector<16x16xf32>
    %c0_30 = arith.constant 0 : index
    %c0_31 = arith.constant 0 : index
    %c0_32 = arith.constant 0 : index
    %31 = vector.load %arg8[%c0_30, %c0_31, %c0_32] : memref<2x16x16xf32, #tpu.memory_space<vmem>>, vector<1x16x16xf32>
    %32 = vector.shape_cast %31 : vector<1x16x16xf32> to vector<16x16xf32>
    %33 = vector.shape_cast %30 : vector<16x16xf32> to vector<1x16x16xf32>
    tpu.vector_store %arg8[%c0_30, %c0_31, %c0_32], %33 {strides = array<i32>} : memref<2x16x16xf32, #tpu.memory_space<vmem>>, vector<1x16x16xf32>,
    %34 = vector.extract_strided_slice %23 {offsets = [0, 16], sizes = [16, 16], strides = [1, 1]} : vector<16x32xf32> to vector<16x16xf32>
    %c1 = arith.constant 1 : index
    %c0_33 = arith.constant 0 : index
    %c0_34 = arith.constant 0 : index
    %35 = vector.load %arg7[%c1, %c0_33, %c0_34] : memref<2x16x16xf32, #tpu.memory_space<vmem>>, vector<1x16x16xf32>
    %36 = vector.shape_cast %35 : vector<1x16x16xf32> to vector<16x16xf32>
    %37 = vector.shape_cast %34 : vector<16x16xf32> to vector<1x16x16xf32>
    tpu.vector_store %arg7[%c1, %c0_33, %c0_34], %37 {strides = array<i32>} : memref<2x16x16xf32, #tpu.memory_space<vmem>>, vector<1x16x16xf32>,
    %38 = vector.extract_strided_slice %25 {offsets = [0, 16], sizes = [16, 16], strides = [1, 1]} : vector<16x32xf32> to vector<16x16xf32>
    %c1_35 = arith.constant 1 : index
    %c0_36 = arith.constant 0 : index
    %c0_37 = arith.constant 0 : index
    %39 = vector.load %arg8[%c1_35, %c0_36, %c0_37] : memref<2x16x16xf32, #tpu.memory_space<vmem>>, vector<1x16x16xf32>
    %40 = vector.shape_cast %39 : vector<1x16x16xf32> to vector<16x16xf32>
    %41 = vector.shape_cast %38 : vector<16x16xf32> to vector<1x16x16xf32>
    tpu.vector_store %arg8[%c1_35, %c0_36, %c0_37], %41 {strides = array<i32>} : memref<2x16x16xf32, #tpu.memory_space<vmem>>, vector<1x16x16xf32>,
    return
  }
  func.func @transform_0(%arg0: i32) -> (i32, i32, i32) {
    %c0_i32 = arith.constant 0 : i32
    %c0_i32_0 = arith.constant 0 : i32
    %c0_i32_1 = arith.constant 0 : i32
    return %arg0, %c0_i32, %c0_i32_0 : i32, i32, i32
  }
  func.func @transform_1(%arg0: i32) -> (i32, i32) {
    %c0_i32 = arith.constant 0 : i32
    %c0_i32_0 = arith.constant 0 : i32
    %c0_i32_1 = arith.constant 0 : i32
    return %c0_i32, %c0_i32_0 : i32, i32
  }
  func.func @transform_2(%arg0: i32) -> (i32, i32) {
    %c0_i32 = arith.constant 0 : i32
    %c0_i32_0 = arith.constant 0 : i32
    %c0_i32_1 = arith.constant 0 : i32
    return %c0_i32, %c0_i32_0 : i32, i32
  }
  func.func @transform_3(%arg0: i32) -> (i32, i32) {
    %c0_i32 = arith.constant 0 : i32
    %c0_i32_0 = arith.constant 0 : i32
    %c0_i32_1 = arith.constant 0 : i32
    return %c0_i32, %c0_i32_0 : i32, i32
  }
  func.func @transform_4(%arg0: i32) -> (i32, i32) {
    %c0_i32 = arith.constant 0 : i32
    %c0_i32_0 = arith.constant 0 : i32
    %c0_i32_1 = arith.constant 0 : i32
    return %c0_i32, %c0_i32_0 : i32, i32
  }
  func.func @transform_5(%arg0: i32) -> (i32, i32) {
    %c0_i32 = arith.constant 0 : i32
    %c0_i32_0 = arith.constant 0 : i32
    %c0_i32_1 = arith.constant 0 : i32
    return %c0_i32, %c0_i32_0 : i32, i32
  }
  func.func @transform_6(%arg0: i32) -> (i32, i32, i32) {
    %c0_i32 = arith.constant 0 : i32
    %c0_i32_0 = arith.constant 0 : i32
    %c0_i32_1 = arith.constant 0 : i32
    return %arg0, %c0_i32, %c0_i32_0 : i32, i32, i32
  }
  func.func @transform_7(%arg0: i32) -> (i32, i32, i32) {
    %c0_i32 = arith.constant 0 : i32
    %c0_i32_0 = arith.constant 0 : i32
    %c0_i32_1 = arith.constant 0 : i32
    return %arg0, %c0_i32, %c0_i32_0 : i32, i32, i32
  }
}

</mosaic_0001>

<llo_original>
// kernel: tpu_custom_call.1
$region0: #{tpu_custom_call.1}
  #allocation0 [shape = 'u32[]', space=smem, size = 0x4, offset = 0x4, fixed_abs, tag = 'smem constant byte address 0x4 - core index']
  #allocation1 [shape = 'u32[72,128]{1,0:T(1,128)}', space=vmem, size = 0x9000, scoped, tag = 'internal scratch']
  #allocation2 [shape = 'f32[16,32]{1,0:T(8,128)}', space=vmem, size = 0x2000, scoped, tag = 'scratch operand']
  #allocation3 [shape = 'f32[16,32]{1,0:T(8,128)}', space=vmem, size = 0x2000, scoped, tag = 'scratch operand']
  %s0 = inlined_call_operand.hbm [shape: f32[2,16,16], index: 0, kind: input, shape index: {}]
  %s1 = inlined_call_operand.hbm [shape: f32[16,16], index: 1, kind: input, shape index: {}]
  %s2 = inlined_call_operand.hbm [shape: f32[16,16], index: 2, kind: input, shape index: {}]
  %s3 = inlined_call_operand.hbm [shape: f32[16,16], index: 3, kind: input, shape index: {}]
  %s4 = inlined_call_operand.hbm [shape: f32[16,16], index: 4, kind: input, shape index: {}]
  %s5 = inlined_call_operand.hbm [shape: f32[16,16], index: 5, kind: input, shape index: {}]
  %s6 = inlined_call_operand.hbm [shape: f32[2,16,16], index: 6, kind: output, shape index: {0}]
  %s7 = inlined_call_operand.hbm [shape: f32[2,16,16], index: 7, kind: output, shape index: {1}]
  %8 = xla_tuple %s6, %s7
  %s9 = sld [smem:[#allocation0]]
  $region66: #{tpu_custom_call.1} parent=0
    _
  %s11 = ssub.s32 1, %s9
  %s12 = scalar_select 0, %s11, %s9
  $region1: #{tpu_custom_call.1} parent=0
    #allocation4 [shape = 'u8[16384]{0}', space=vmem, size = 0x4000, scoped, tag = 'input window, operand 0, single buffered']
    #allocation5 [shape = 's32[1]{0}', space=sflag, size = 0x4, scoped, tag = 'scoped memory for tpu_custom_call.1']
    #allocation6 [shape = 's32[1]{0}', space=sflag, size = 0x4, scoped, tag = 'scoped memory for tpu_custom_call.1']
    #allocation7 [shape = 'u8[8192]{0}', space=vmem, size = 0x2000, scoped, tag = 'input window, operand 1, single buffered']
    #allocation8 [shape = 's32[1]{0}', space=sflag, size = 0x4, scoped, tag = 'scoped memory for tpu_custom_call.1']
    #allocation9 [shape = 'u8[8192]{0}', space=vmem, size = 0x2000, scoped, tag = 'input window, operand 2, single buffered']
    #allocation10 [shape = 'u8[8192]{0}', space=vmem, size = 0x2000, scoped, tag = 'input window, operand 3, single buffered']
    #allocation11 [shape = 's32[1]{0}', space=sflag, size = 0x4, scoped, tag = 'scoped memory for tpu_custom_call.1']
    #allocation12 [shape = 'u8[8192]{0}', space=vmem, size = 0x2000, scoped, tag = 'input window, operand 4, single buffered']
    #allocation13 [shape = 'u8[8192]{0}', space=vmem, size = 0x2000, scoped, tag = 'input window, operand 5, single buffered']
    #allocation14 [shape = 's32[1]{0}', space=sflag, size = 0x4, scoped, tag = 'scoped memory for tpu_custom_call.1']
    #allocation15 [shape = 'u8[16384]{0}', space=vmem, size = 0x4000, scoped, tag = 'output window, operand 0, single buffered']
    #allocation16 [shape = 'u8[16384]{0}', space=vmem, size = 0x4000, scoped, tag = 'output window, operand 1, single buffered']
    #allocation17 [shape = 's32[1]{0}', space=sflag, size = 0x4, scoped, tag = 'scoped memory for tpu_custom_call.1']
    %13 = vsyncpa [#allocation5], 0
    %14 = vsyncpa [#allocation8], 0
    %15 = vsyncpa [#allocation11], 0
    %16 = vsyncpa [#allocation14], 0
    %17 = vsyncpa [#allocation6], 0
    %18 = vsyncpa [#allocation17], 0
    // Predicated region
    $region2: #{tpu_custom_call.1} parent=1 // pred_check
      _
    $region3: #{tpu_custom_call.1} parent=1 // pred_check_branch
      %20 = sbr.rel (0) target = $region5
    $region4: #{tpu_custom_call.1} parent=1 // pred_region
      %22 = vsyncadd [#allocation5], 0
      %s23 = sshll.u32 %s0, 4
      %s24 = int_to_ptr.hbm [resolvable:$true] %s23
      %s25 = sshll.u32 [#allocation4], 4
      %s26 = int_to_ptr.vmem [resolvable:$true] %s25
      %31 = dma.hbm_to_vmem [thread:$0]  %s24, 512, %s26, [#allocation5], 128, 128, 8
    $region5: #{tpu_custom_call.1} parent=1 // pred_fallthru
      _
    // Predicated region
    $region6: #{tpu_custom_call.1} parent=1 // pred_check
      _
    $region7: #{tpu_custom_call.1} parent=1 // pred_check_branch
      %33 = sbr.rel (0) target = $region9
    $region8: #{tpu_custom_call.1} parent=1 // pred_region
      %35 = vsyncadd [#allocation8], 0
      %s36 = sshll.u32 %s1, 4
      %s37 = int_to_ptr.hbm [resolvable:$true] %s36
      %s38 = sshll.u32 [#allocation7], 4
      %s39 = int_to_ptr.vmem [resolvable:$true] %s38
      %44 = dma.hbm_to_vmem [thread:$0]  %s37, 256, %s39, [#allocation8], 128, 128, 8
    $region9: #{tpu_custom_call.1} parent=1 // pred_fallthru
      _
    // Predicated region
    $region10: #{tpu_custom_call.1} parent=1 // pred_check
      _
    $region11: #{tpu_custom_call.1} parent=1 // pred_check_branch
      %46 = sbr.rel (0) target = $region13
    $region12: #{tpu_custom_call.1} parent=1 // pred_region
      %48 = vsyncadd [#allocation8], 0
      %s49 = sshll.u32 %s2, 4
      %s50 = int_to_ptr.hbm [resolvable:$true] %s49
      %s51 = sshll.u32 [#allocation9], 4
      %s52 = int_to_ptr.vmem [resolvable:$true] %s51
      %57 = dma.hbm_to_vmem [thread:$0]  %s50, 256, %s52, [#allocation8], 128, 128, 8
    $region13: #{tpu_custom_call.1} parent=1 // pred_fallthru
      _
    // Predicated region
    $region14: #{tpu_custom_call.1} parent=1 // pred_check
      _
    $region15: #{tpu_custom_call.1} parent=1 // pred_check_branch
      %59 = sbr.rel (0) target = $region17
    $region16: #{tpu_custom_call.1} parent=1 // pred_region
      %61 = vsyncadd [#allocation11], 0
      %s62 = sshll.u32 %s3, 4
      %s63 = int_to_ptr.hbm [resolvable:$true] %s62
      %s64 = sshll.u32 [#allocation10], 4
      %s65 = int_to_ptr.vmem [resolvable:$true] %s64
      %70 = dma.hbm_to_vmem [thread:$0]  %s63, 256, %s65, [#allocation11], 128, 128, 8
    $region17: #{tpu_custom_call.1} parent=1 // pred_fallthru
      _
    // Predicated region
    $region18: #{tpu_custom_call.1} parent=1 // pred_check
      _
    $region19: #{tpu_custom_call.1} parent=1 // pred_check_branch
      %72 = sbr.rel (0) target = $region21
    $region20: #{tpu_custom_call.1} parent=1 // pred_region
      %74 = vsyncadd [#allocation11], 0
      %s75 = sshll.u32 %s4, 4
      %s76 = int_to_ptr.hbm [resolvable:$true] %s75
      %s77 = sshll.u32 [#allocation12], 4
      %s78 = int_to_ptr.vmem [resolvable:$true] %s77
      %83 = dma.hbm_to_vmem [thread:$0]  %s76, 256, %s78, [#allocation11], 128, 128, 8
    $region21: #{tpu_custom_call.1} parent=1 // pred_fallthru
      _
    // Predicated region
    $region22: #{tpu_custom_call.1} parent=1 // pred_check
      _
    $region23: #{tpu_custom_call.1} parent=1 // pred_check_branch
      %85 = sbr.rel (0) target = $region25
    $region24: #{tpu_custom_call.1} parent=1 // pred_region
      %87 = vsyncadd [#allocation14], 0
      %s88 = sshll.u32 %s5, 4
      %s89 = int_to_ptr.hbm [resolvable:$true] %s88
      %s90 = sshll.u32 [#allocation13], 4
      %s91 = int_to_ptr.vmem [resolvable:$true] %s90
      %96 = dma.hbm_to_vmem [thread:$0]  %s89, 256, %s91, [#allocation14], 128, 128, 8
    $region25: #{tpu_custom_call.1} parent=1 // pred_fallthru
      _
    // Predicated region
    $region26: #{tpu_custom_call.1} parent=1 // pred_check
      _
    $region27: #{tpu_custom_call.1} parent=1 // pred_check_branch
      %98 = sbr.rel (0) target = $region29
    $region28: #{tpu_custom_call.1} parent=1 // pred_region
      %100 = dma.done [#allocation5], 512
    $region29: #{tpu_custom_call.1} parent=1 // pred_fallthru
      _
    // Predicated region
    $region30: #{tpu_custom_call.1} parent=1 // pred_check
      _
    $region31: #{tpu_custom_call.1} parent=1 // pred_check_branch
      %102 = sbr.rel (0) target = $region33
    $region32: #{tpu_custom_call.1} parent=1 // pred_region
      %104 = dma.done [#allocation8], 256
    $region33: #{tpu_custom_call.1} parent=1 // pred_fallthru
      _
    // Predicated region
    $region34: #{tpu_custom_call.1} parent=1 // pred_check
      _
    $region35: #{tpu_custom_call.1} parent=1 // pred_check_branch
      %106 = sbr.rel (0) target = $region37
    $region36: #{tpu_custom_call.1} parent=1 // pred_region
      %108 = dma.done [#allocation8], 256
    $region37: #{tpu_custom_call.1} parent=1 // pred_fallthru
      _
    // Predicated region
    $region38: #{tpu_custom_call.1} parent=1 // pred_check
      _
    $region39: #{tpu_custom_call.1} parent=1 // pred_check_branch
      %110 = sbr.rel (0) target = $region41
    $region40: #{tpu_custom_call.1} parent=1 // pred_region
      %112 = dma.done [#allocation11], 256
    $region41: #{tpu_custom_call.1} parent=1 // pred_fallthru
      _
    // Predicated region
    $region42: #{tpu_custom_call.1} parent=1 // pred_check
      _
    $region43: #{tpu_custom_call.1} parent=1 // pred_check_branch
      %114 = sbr.rel (0) target = $region45
    $region44: #{tpu_custom_call.1} parent=1 // pred_region
      %116 = dma.done [#allocation11], 256
    $region45: #{tpu_custom_call.1} parent=1 // pred_fallthru
      _
    // Predicated region
    $region46: #{tpu_custom_call.1} parent=1 // pred_check
      _
    $region47: #{tpu_custom_call.1} parent=1 // pred_check_branch
      %118 = sbr.rel (0) target = $region49
    $region48: #{tpu_custom_call.1} parent=1 // pred_region
      %120 = dma.done [#allocation14], 256
    $region49: #{tpu_custom_call.1} parent=1 // pred_fallthru
      _
    %v121 = vld [vmem:[#allocation4] sm:$0xff]
    %v122 = vld [vmem:[#allocation4 + $0x8] sm:$0xff]
    %v123 = vld [vmem:[#allocation4 + $0x10] sm:$0xff]
    %v124 = vld [vmem:[#allocation4 + $0x18] sm:$0xff]
    %v125 = vld [vmem:[#allocation7] sm:$0xff]
    %v126 = vld [vmem:[#allocation7 + $0x8] sm:$0xff]
    %vm127 = vcmask 130048
    %v129 = vsel %vm127, %v121, 0
    %v132 = vsel %vm127, %v122, 0
    %v135 = vsel %vm127, %v123, 0
    %v138 = vsel %vm127, %v124, 0
    %140 = vmatpush.msra.mxu0 0.0
    %141 = vmatpush.msra.mxu0 0.0
    %142 = vmatpush.msra.mxu0 0.0
    %143 = vmatpush.msra.mxu0 0.0
    %144 = vmatpush.msra.mxu0 0.0
    %145 = vmatpush.msra.mxu0 0.0
    %146 = vmatpush.msra.mxu0 0.0
    %147 = vmatpush.msra.mxu0 0.0
    %148 = vmatpush.msra.mxu0 0.0
    %149 = vmatpush.msra.mxu0 0.0
    %150 = vmatpush.msra.mxu0 0.0
    %151 = vmatpush.msra.mxu0 0.0
    %152 = vmatpush.msra.mxu0 0.0
    %153 = vmatpush.msra.mxu0 0.0
    %154 = vmatpush.msra.mxu0 %v126
    %155 = vmatpush.msra.mxu0 %v125
    %156 = vmatmul.f32.gmra.mxu0 %v129
    %v157 = vpop.f32.mrf.mxu0
    %v158 = vadd.f32 0.0, %v157
    %159 = vmatmul.f32.gmra.mxu0 %v132
    %v160 = vpop.f32.mrf.mxu0
    %v161 = vadd.f32 0.0, %v160
    %162 = vmatmul.f32.gmra.mxu0 %v135
    %v163 = vpop.f32.mrf.mxu0
    %v164 = vadd.f32 0.0, %v163
    %165 = vmatmul.f32.gmra.mxu0 %v138
    %v166 = vpop.f32.mrf.mxu0
    %v167 = vadd.f32 0.0, %v166
    %168 = vdwg.mxu0
    %v169 = vld [vmem:[#allocation9] sm:$0xff]
    %v170 = vld [vmem:[#allocation9 + $0x8] sm:$0xff]
    %171 = vmatpush.msra.mxu0 0.0
    %172 = vmatpush.msra.mxu0 0.0
    %173 = vmatpush.msra.mxu0 0.0
    %174 = vmatpush.msra.mxu0 0.0
    %175 = vmatpush.msra.mxu0 0.0
    %176 = vmatpush.msra.mxu0 0.0
    %177 = vmatpush.msra.mxu0 0.0
    %178 = vmatpush.msra.mxu0 0.0
    %179 = vmatpush.msra.mxu0 0.0
    %180 = vmatpush.msra.mxu0 0.0
    %181 = vmatpush.msra.mxu0 0.0
    %182 = vmatpush.msra.mxu0 0.0
    %183 = vmatpush.msra.mxu0 0.0
    %184 = vmatpush.msra.mxu0 0.0
    %185 = vmatpush.msra.mxu0 %v170
    %186 = vmatpush.msra.mxu0 %v169
    %187 = vmatmul.f32.gmra.mxu0 %v129
    %v188 = vpop.f32.mrf.mxu0
    %v189 = vadd.f32 0.0, %v188
    %190 = vmatmul.f32.gmra.mxu0 %v132
    %v191 = vpop.f32.mrf.mxu0
    %v192 = vadd.f32 0.0, %v191
    %193 = vmatmul.f32.gmra.mxu0 %v135
    %v194 = vpop.f32.mrf.mxu0
    %v195 = vadd.f32 0.0, %v194
    %196 = vmatmul.f32.gmra.mxu0 %v138
    %v197 = vpop.f32.mrf.mxu0
    %v198 = vadd.f32 0.0, %v197
    %199 = vdwg.mxu0
    %200 = vst.msk [vmem:[#allocation2] sm:$0xff] %vm127, %v158
    %201 = vst.msk [vmem:[#allocation2 + $0x8] sm:$0xff] %vm127, %v161
    %202 = vst.msk [vmem:[#allocation3] sm:$0xff] %vm127, %v189
    %203 = vst.msk [vmem:[#allocation3 + $0x8] sm:$0xff] %vm127, %v192
    %206 = vrot.lane.b32.xlu0 %v164, 16
    %v207 = vpop.permute.xlu0 %206
    %208 = vrot.lane.b32.xlu0 %v167, 16
    %v209 = vpop.permute.xlu0 %208
    %vm212 = vcmask 261248
    %213 = vst.msk [vmem:[#allocation2] sm:$0xff] %vm212, %v207
    %214 = vst.msk [vmem:[#allocation2 + $0x8] sm:$0xff] %vm212, %v209
    %217 = vrot.lane.b32.xlu0 %v195, 16
    %v218 = vpop.permute.xlu0 %217
    %219 = vrot.lane.b32.xlu0 %v198, 16
    %v220 = vpop.permute.xlu0 %219
    %223 = vst.msk [vmem:[#allocation3] sm:$0xff] %vm212, %v218
    %224 = vst.msk [vmem:[#allocation3 + $0x8] sm:$0xff] %vm212, %v220
    %v225 = vld [vmem:[#allocation2] sm:$0xff]
    %v226 = vld [vmem:[#allocation2 + $0x8] sm:$0xff]
    %v227 = vld [vmem:[#allocation3] sm:$0xff]
    %v228 = vld [vmem:[#allocation3 + $0x8] sm:$0xff]
    %v229 = vld [vmem:[#allocation10] sm:$0xff]
    %v230 = vld [vmem:[#allocation10 + $0x8] sm:$0xff]
    %v232 = vsel %vm127, %v229, 0
    %v235 = vsel %vm127, %v230, 0
    %237 = vmatpush.msra.mxu0 0.0
    %238 = vmatpush.msra.mxu0 0.0
    %239 = vmatpush.msra.mxu0 0.0
    %240 = vmatpush.msra.mxu0 0.0
    %241 = vmatpush.msra.mxu0 0.0
    %242 = vmatpush.msra.mxu0 0.0
    %243 = vmatpush.msra.mxu0 0.0
    %244 = vmatpush.msra.mxu0 0.0
    %245 = vmatpush.msra.mxu0 0.0
    %246 = vmatpush.msra.mxu0 0.0
    %247 = vmatpush.msra.mxu0 0.0
    %248 = vmatpush.msra.mxu0 0.0
    %249 = vmatpush.msra.mxu0 0.0
    %250 = vmatpush.msra.mxu0 0.0
    %251 = vmatpush.msra.mxu0 %v226
    %252 = vmatpush.msra.mxu0 %v225
    %253 = vmatmul.f32.gmra.mxu0 %v232
    %v254 = vpop.f32.mrf.mxu0
    %v255 = vadd.f32 0.0, %v254
    %256 = vmatmul.f32.gmra.mxu0 %v235
    %v257 = vpop.f32.mrf.mxu0
    %v258 = vadd.f32 0.0, %v257
    %259 = vdwg.mxu0
    %v260 = vld [vmem:[#allocation12] sm:$0xff]
    %v261 = vld [vmem:[#allocation12 + $0x8] sm:$0xff]
    %v263 = vsel %vm127, %v260, 0
    %v266 = vsel %vm127, %v261, 0
    %268 = vmatpush.msra.mxu0 0.0
    %269 = vmatpush.msra.mxu0 0.0
    %270 = vmatpush.msra.mxu0 0.0
    %271 = vmatpush.msra.mxu0 0.0
    %272 = vmatpush.msra.mxu0 0.0
    %273 = vmatpush.msra.mxu0 0.0
    %274 = vmatpush.msra.mxu0 0.0
    %275 = vmatpush.msra.mxu0 0.0
    %276 = vmatpush.msra.mxu0 0.0
    %277 = vmatpush.msra.mxu0 0.0
    %278 = vmatpush.msra.mxu0 0.0
    %279 = vmatpush.msra.mxu0 0.0
    %280 = vmatpush.msra.mxu0 0.0
    %281 = vmatpush.msra.mxu0 0.0
    %282 = vmatpush.msra.mxu0 %v228
    %283 = vmatpush.msra.mxu0 %v227
    %284 = vmatmul.f32.gmra.mxu0 %v263
    %v285 = vpop.f32.mrf.mxu0
    %v286 = vadd.f32 0.0, %v285
    %287 = vmatmul.f32.gmra.mxu0 %v266
    %v288 = vpop.f32.mrf.mxu0
    %v289 = vadd.f32 0.0, %v288
    %290 = vdwg.mxu0
    %v291 = vld [vmem:[#allocation13] sm:$0xff]
    %v292 = vld [vmem:[#allocation13 + $0x8] sm:$0xff]
    %v293 = vadd.f32 %v225, %v227
    %v294 = vadd.f32 %v226, %v228
    %v296 = vsel %vm127, %v291, 0
    %v299 = vsel %vm127, %v292, 0
    %301 = vmatpush.msra.mxu0 0.0
    %302 = vmatpush.msra.mxu0 0.0
    %303 = vmatpush.msra.mxu0 0.0
    %304 = vmatpush.msra.mxu0 0.0
    %305 = vmatpush.msra.mxu0 0.0
    %306 = vmatpush.msra.mxu0 0.0
    %307 = vmatpush.msra.mxu0 0.0
    %308 = vmatpush.msra.mxu0 0.0
    %309 = vmatpush.msra.mxu0 0.0
    %310 = vmatpush.msra.mxu0 0.0
    %311 = vmatpush.msra.mxu0 0.0
    %312 = vmatpush.msra.mxu0 0.0
    %313 = vmatpush.msra.mxu0 0.0
    %314 = vmatpush.msra.mxu0 0.0
    %315 = vmatpush.msra.mxu0 %v294
    %316 = vmatpush.msra.mxu0 %v293
    %317 = vmatmul.f32.gmra.mxu0 %v296
    %v318 = vpop.f32.mrf.mxu0
    %v319 = vadd.f32 0.0, %v318
    %320 = vmatmul.f32.gmra.mxu0 %v299
    %v321 = vpop.f32.mrf.mxu0
    %v322 = vadd.f32 0.0, %v321
    %323 = vdwg.mxu0
    %v324 = vsub.f32 %v255, %v286
    %v325 = vsub.f32 %v258, %v289
    %v326 = vsub.f32 %v319, %v255
    %v327 = vsub.f32 %v322, %v258
    %v328 = vsub.f32 %v326, %v286
    %v329 = vsub.f32 %v327, %v289
    %330 = vst.msk [vmem:[#allocation15] sm:$0xff] %vm127, %v324
    %331 = vst.msk [vmem:[#allocation15 + $0x8] sm:$0xff] %vm127, %v325
    %332 = vst.msk [vmem:[#allocation16] sm:$0xff] %vm127, %v328
    %333 = vst.msk [vmem:[#allocation16 + $0x8] sm:$0xff] %vm127, %v329
    %336 = vrot.lane.b32.xlu0 %v324, 112
    %v337 = vpop.permute.xlu0 %336
    %338 = vrot.lane.b32.xlu0 %v325, 112
    %v339 = vpop.permute.xlu0 %338
    %s342 = scalar_lea.vmem [#allocation15], 16
    %343 = vst.msk [vmem:[%s342] sm:$0xff] %vm127, %v337
    %344 = vst.msk [vmem:[%s342 + $0x8] sm:$0xff] %vm127, %v339
    %347 = vrot.lane.b32.xlu0 %v328, 112
    %v348 = vpop.permute.xlu0 %347
    %349 = vrot.lane.b32.xlu0 %v329, 112
    %v350 = vpop.permute.xlu0 %349
    %s353 = scalar_lea.vmem [#allocation16], 16
    %354 = vst.msk [vmem:[%s353] sm:$0xff] %vm127, %v348
    %355 = vst.msk [vmem:[%s353 + $0x8] sm:$0xff] %vm127, %v350
    // Predicated region
    $region50: #{tpu_custom_call.1} parent=1 // pred_check
      _
    $region51: #{tpu_custom_call.1} parent=1 // pred_check_branch
      %357 = sbr.rel (0) target = $region53
    $region52: #{tpu_custom_call.1} parent=1 // pred_region
      %359 = vsyncadd [#allocation6], 0
      %s360 = sshll.u32 [#allocation15], 4
      %s361 = int_to_ptr.vmem [resolvable:$true] %s360
      %s362 = sshll.u32 %s6, 4
      %s363 = int_to_ptr.hbm [resolvable:$true] %s362
      %368 = dma.vmem_to_hbm [thread:$0]  %s361, 512, %s363, [#allocation6], 128, 128, 8
    $region53: #{tpu_custom_call.1} parent=1 // pred_fallthru
      _
    // Predicated region
    $region54: #{tpu_custom_call.1} parent=1 // pred_check
      _
    $region55: #{tpu_custom_call.1} parent=1 // pred_check_branch
      %370 = sbr.rel (0) target = $region57
    $region56: #{tpu_custom_call.1} parent=1 // pred_region
      %372 = vsyncadd [#allocation17], 0
      %s373 = sshll.u32 [#allocation16], 4
      %s374 = int_to_ptr.vmem [resolvable:$true] %s373
      %s375 = sshll.u32 %s7, 4
      %s376 = int_to_ptr.hbm [resolvable:$true] %s375
      %381 = dma.vmem_to_hbm [thread:$0]  %s374, 512, %s376, [#allocation17], 128, 128, 8
    $region57: #{tpu_custom_call.1} parent=1 // pred_fallthru
      _
    // Predicated region
    $region58: #{tpu_custom_call.1} parent=1 // pred_check
      _
    $region59: #{tpu_custom_call.1} parent=1 // pred_check_branch
      %383 = sbr.rel (0) target = $region61
    $region60: #{tpu_custom_call.1} parent=1 // pred_region
      %385 = dma.done [#allocation6], 512
    $region61: #{tpu_custom_call.1} parent=1 // pred_fallthru
      _
    // Predicated region
    $region62: #{tpu_custom_call.1} parent=1 // pred_check
      _
    $region63: #{tpu_custom_call.1} parent=1 // pred_check_branch
      %387 = sbr.rel (0) target = $region65
    $region64: #{tpu_custom_call.1} parent=1 // pred_region
      %389 = dma.done [#allocation17], 512
    $region65: #{tpu_custom_call.1} parent=1 // pred_fallthru
      _
    %390 = vsyncpa [#allocation5], 1
    %391 = vsyncpa [#allocation8], 1
    %392 = vsyncpa [#allocation11], 1
    %393 = vsyncpa [#allocation14], 1
    %394 = vsyncpa [#allocation6], 1
    %395 = vsyncpa [#allocation17], 1

</llo_original>
